<compile_context>
chip_gen: v5e
topology: v5e:2x2
jax: 0.10.0
libtpu: 0.0.40
codegen_flags: <defaults>
</compile_context>

<pallas_src>
import jax
import jax.numpy as jnp
from jax.experimental import pallas as pl
from jax.experimental.pallas import tpu as pltpu

KERNEL_SIZE = 3  # SpatialAttention(kernel_size=3) -> padding=1


def _make_kernel(H, W):
    """Build the kernel body, closing over static spatial dims H, W."""
    HW = H * W

    def kernel(w_ref, x_ref, o_ref):
        # w_ref: SMEM (27,) f32 -- conv weight flattened as (in_ch=3, kh=3, kw=3)
        # x_ref: VMEM (BN, C, HW)
        # o_ref: VMEM (BN, 1, HW)
        C = x_ref.shape[1]
        f32 = jnp.float32

        # ---- fused single-pass channel reduction: running min / sum / max ----
        x0 = x_ref[:, 0, :].astype(f32)            # (BN, HW)
        mn = x0
        mx = x0
        sm = x0
        for c in range(1, C):                       # static unroll (C is small)
            xc = x_ref[:, c, :].astype(f32)
            mn = jnp.minimum(mn, xc)
            mx = jnp.maximum(mx, xc)
            sm = sm + xc
        avg = sm * (1.0 / C)
        stats = (mn, avg, mx)  # matches torch.cat([min, avg, max], dim=1)

        # ---- boundary masks, computed once per block (4 planes, not 27) ----
        pos = jax.lax.broadcasted_iota(jnp.int32, (1, HW), 1)
        col = pos % W
        row_ok_m1 = (pos >= W).astype(f32)             # dy = -1 valid rows
        row_ok_p1 = (pos < (H - 1) * W).astype(f32)    # dy = +1 valid rows
        col_ok_m1 = (col >= 1).astype(f32)             # dx = -1 valid cols
        col_ok_p1 = (col < (W - 1)).astype(f32)        # dx = +1 valid cols

        # ---- 9 row-shifted, row-masked stat planes A[c][ky] (ky: dy=-1,0,+1) ----
        # shifted_dy[p] = s[p + dy*W]  (zero outside valid rows)
        A = []
        for c in range(3):
            s = stats[c]
            A.append((
                jnp.roll(s, W, axis=-1) * row_ok_m1,    # dy = -1
                s,                                       # dy =  0 (no roll, no mask)
                jnp.roll(s, -W, axis=-1) * row_ok_p1,   # dy = +1
            ))

        # ---- per-dx weighted partials (9 scalar MACs each), then one lane
        #      roll + one column mask per dx (skip both for dx == 0) ----
        def partial(kx):
            p = None
            for c in range(3):
                for ky in range(3):
                    w = w_ref[c * 9 + ky * 3 + kx]
                    term = w * A[c][ky]
                    p = term if p is None else p + term
            return p

        acc = partial(1)                                            # dx =  0
        acc = acc + jnp.roll(partial(0), 1, axis=-1) * col_ok_m1    # dx = -1
        acc = acc + jnp.roll(partial(2), -1, axis=-1) * col_ok_p1   # dx = +1

        o_ref[:, 0, :] = jax.nn.sigmoid(acc).astype(o_ref.dtype)

    return kernel


def spatial_attention(x, conv_weight, *, target_block_bytes=4 * 1024 * 1024):
    """x: (N, C, H, W). conv_weight: (1, 3, 3, 3) (PyTorch OIHW). Returns (N,1,H,W)."""
    N, C, H, W = x.shape
    HW = H * W
    xf = x.reshape(N, C, HW)                       # lane-dense spatial layout
    w_flat = conv_weight.reshape(-1).astype(jnp.float32)   # (27,)

    # Batch-tile so each grid step moves several MiB (amortizes ~0.35us/step
    # pipeline overhead); keep bn a divisor of N so every block is full.
    itemsize = jnp.dtype(x.dtype).itemsize
    per_batch = C * HW * itemsize
    bn = max(1, min(N, target_block_bytes // max(per_batch, 1)))
    while N % bn:
        bn -= 1
    grid = (N // bn,)
    # NOTE: for single-image (N==1) inference on v7x (2 TCs), a second
    # parallel grid axis over H-tiles with a 1-row halo would keep both cores
    # busy; omitted here since the 3x3 halo handling is only worth it for
    # large spatial extents.

    cost = pl.CostEstimate(
        flops=N * HW * (3 * C + 2 * 27 + 4),       # reductions + conv MACs
        transcendentals=N * HW,                    # sigmoid
        bytes_accessed=N * C * HW * itemsize + N * HW * itemsize + 27 * 4,
    )

    out = pl.pallas_call(
        _make_kernel(H, W),
        out_shape=jax.ShapeDtypeStruct((N, 1, HW), x.dtype),
        grid=grid,
        in_specs=[
            pl.BlockSpec(memory_space=pltpu.MemorySpace.SMEM),        # weights
            pl.BlockSpec((bn, C, HW), lambda b: (b, 0, 0)),           # x tile
        ],
        out_specs=pl.BlockSpec((bn, 1, HW), lambda b: (b, 0, 0)),
        compiler_params=pltpu.CompilerParams(
            dimension_semantics=("parallel",),
            vmem_limit_bytes=32 * 1024 * 1024,     # raise v5e 16MiB default; safe on v7x
        ),
        cost_estimate=cost,
    )(w_flat, xf)
    return out.reshape(N, 1, H, W)


def reference_spatial_attention(x, conv_weight):
    """Pure-JAX reference matching the PyTorch forward exactly."""
    mn = jnp.min(x, axis=1, keepdims=True)
    avg = jnp.mean(x, axis=1, keepdims=True)
    mx = jnp.max(x, axis=1, keepdims=True)
    s = jnp.concatenate([mn, avg, mx], axis=1)             # (N, 3, H, W)
    y = jax.lax.conv_general_dilated(
        s, conv_weight, window_strides=(1, 1), padding=((1, 1), (1, 1)),
        dimension_numbers=("NCHW", "OIHW", "NCHW"))
    return jax.nn.sigmoid(y)


if __name__ == "__main__":
    key = jax.random.PRNGKey(0)
    kx, kw = jax.random.split(key)

    # Small deterministic example: batch=2, channels=4, spatial=16x16.
    x = jax.random.normal(kx, (2, 4, 16, 16), dtype=jnp.float32)

    # Deterministic Conv2d(3, 1, 3, bias=False) weight init (uniform, fan_in=27).
    fan_in = 3 * KERNEL_SIZE * KERNEL_SIZE
    bound = 1.0 / jnp.sqrt(jnp.float32(fan_in))
    conv_w = jax.random.uniform(kw, (1, 3, KERNEL_SIZE, KERNEL_SIZE),
                                dtype=jnp.float32, minval=-bound, maxval=bound)

    out = spatial_attention(x, conv_w)
    out = jax.block_until_ready(out)

    ref = reference_spatial_attention(x, conv_w)
    assert out.shape == (2, 1, 16, 16)
    assert jnp.allclose(out, ref, atol=1e-5, rtol=1e-5), "mismatch vs reference"

    print("KERNEL_OK")
</pallas_src>

<mosaic_0001>
module attributes {stable_mosaic.version = 11 : i64} {
  func.func @kernel(%arg0: i32, %arg1: memref<27xf32, #tpu.memory_space<smem>>, %arg2: memref<2x4x256xf32, #tpu.memory_space<vmem>>, %arg3: memref<2x1x256xf32, #tpu.memory_space<vmem>>) attributes {dimension_semantics = [#tpu.dimension_semantics<parallel>], iteration_bounds = array<i64: 1>, scalar_prefetch = 0 : i64, scratch_operands = 0 : i64, tpu.core_type = #tpu.core_type<tc>, window_params = [{transform_indices = @transform_0, window_bounds = array<i64: 27>}, {transform_indices = @transform_1, window_bounds = array<i64: 2, 4, 256>}, {transform_indices = @transform_2, window_bounds = array<i64: 2, 1, 256>}]} {
    %c0 = arith.constant 0 : index
    %c0_0 = arith.constant 0 : index
    %c0_1 = arith.constant 0 : index
    %0 = vector.load %arg2[%c0, %c0_0, %c0_1] : memref<2x4x256xf32, #tpu.memory_space<vmem>>, vector<2x1x256xf32>
    %1 = vector.shape_cast %0 : vector<2x1x256xf32> to vector<2x256xf32>
    %c0_2 = arith.constant 0 : index
    %c1 = arith.constant 1 : index
    %c0_3 = arith.constant 0 : index
    %2 = vector.load %arg2[%c0_2, %c1, %c0_3] : memref<2x4x256xf32, #tpu.memory_space<vmem>>, vector<2x1x256xf32>
    %3 = vector.shape_cast %2 : vector<2x1x256xf32> to vector<2x256xf32>
    %4 = arith.minimumf %1, %3 : vector<2x256xf32>
    %5 = arith.maximumf %1, %3 : vector<2x256xf32>
    %6 = arith.addf %1, %3 : vector<2x256xf32>
    %c0_4 = arith.constant 0 : index
    %c2 = arith.constant 2 : index
    %c0_5 = arith.constant 0 : index
    %7 = vector.load %arg2[%c0_4, %c2, %c0_5] : memref<2x4x256xf32, #tpu.memory_space<vmem>>, vector<2x1x256xf32>
    %8 = vector.shape_cast %7 : vector<2x1x256xf32> to vector<2x256xf32>
    %9 = arith.minimumf %4, %8 : vector<2x256xf32>
    %10 = arith.maximumf %5, %8 : vector<2x256xf32>
    %11 = arith.addf %6, %8 : vector<2x256xf32>
    %c0_6 = arith.constant 0 : index
    %c3 = arith.constant 3 : index
    %c0_7 = arith.constant 0 : index
    %12 = vector.load %arg2[%c0_6, %c3, %c0_7] : memref<2x4x256xf32, #tpu.memory_space<vmem>>, vector<2x1x256xf32>
    %13 = vector.shape_cast %12 : vector<2x1x256xf32> to vector<2x256xf32>
    %14 = arith.minimumf %9, %13 : vector<2x256xf32>
    %15 = arith.maximumf %10, %13 : vector<2x256xf32>
    %16 = arith.addf %11, %13 : vector<2x256xf32>
    %cst = arith.constant 2.500000e-01 : f32
    %17 = vector.broadcast %cst : f32 to vector<2x256xf32>
    %18 = arith.mulf %16, %17 : vector<2x256xf32>
    %19 = tpu.iota {dimensions = array<i32: 1>} : vector<1x256xi32>
    %c16_i32 = arith.constant 16 : i32
    %c0_i32 = arith.constant 0 : i32
    %20 = arith.cmpi eq, %c16_i32, %c0_i32 : i32
    %c1_i32 = arith.constant 1 : i32
    %21 = arith.select %20, %c1_i32, %c16_i32 : i32
    %22 = vector.broadcast %21 : i32 to vector<1x256xi32>
    %23 = arith.remsi %19, %22 : vector<1x256xi32>
    %c0_i32_8 = arith.constant 0 : i32
    %24 = vector.broadcast %c0_i32_8 : i32 to vector<1x256xi32>
    %25 = arith.cmpi ne, %23, %24 : vector<1x256xi32>
    %c0_i32_9 = arith.constant 0 : i32
    %26 = vector.broadcast %c0_i32_9 : i32 to vector<1x256xi32>
    %27 = arith.cmpi slt, %23, %26 : vector<1x256xi32>
    %c0_i32_10 = arith.constant 0 : i32
    %28 = arith.cmpi slt, %21, %c0_i32_10 : i32
    %29 = vector.broadcast %28 : i1 to vector<1x256xi1>
    %30 = vector.broadcast %29 : vector<1x256xi1> to vector<1x256xi1>
    %31 = arith.xori %27, %30 : vector<1x256xi1>
    %32 = arith.andi %31, %25 : vector<1x256xi1>
    %33 = vector.broadcast %21 : i32 to vector<1x256xi32>
    %34 = arith.addi %23, %33 : vector<1x256xi32>
    %35 = arith.select %32, %34, %23 : vector<1x256xi1>, vector<1x256xi32>
    %c16_i32_11 = arith.constant 16 : i32
    %36 = vector.broadcast %c16_i32_11 : i32 to vector<1x256xi32>
    %37 = arith.cmpi sge, %19, %36 : vector<1x256xi32>
    %38 = arith.extui %37 : vector<1x256xi1> to vector<1x256xi32>
    %39 = arith.sitofp %38 : vector<1x256xi32> to vector<1x256xf32>
    %c240_i32 = arith.constant 240 : i32
    %40 = vector.broadcast %c240_i32 : i32 to vector<1x256xi32>
    %41 = arith.cmpi slt, %19, %40 : vector<1x256xi32>
    %42 = arith.extui %41 : vector<1x256xi1> to vector<1x256xi32>
    %43 = arith.sitofp %42 : vector<1x256xi32> to vector<1x256xf32>
    %c1_i32_12 = arith.constant 1 : i32
    %44 = vector.broadcast %c1_i32_12 : i32 to vector<1x256xi32>
    %45 = arith.cmpi sge, %35, %44 : vector<1x256xi32>
    %46 = arith.extui %45 : vector<1x256xi1> to vector<1x256xi32>
    %47 = arith.sitofp %46 : vector<1x256xi32> to vector<1x256xf32>
    %c15_i32 = arith.constant 15 : i32
    %48 = vector.broadcast %c15_i32 : i32 to vector<1x256xi32>
    %49 = arith.cmpi slt, %35, %48 : vector<1x256xi32>
    %50 = arith.extui %49 : vector<1x256xi1> to vector<1x256xi32>
    %51 = arith.sitofp %50 : vector<1x256xi32> to vector<1x256xf32>
    %52 = vector.extract_strided_slice %14 {offsets = [0, 240], sizes = [2, 16], strides = [1, 1]} : vector<2x256xf32> to vector<2x16xf32>
    %53 = vector.extract_strided_slice %14 {offsets = [0, 0], sizes = [2, 240], strides = [1, 1]} : vector<2x256xf32> to vector<2x240xf32>
    %54 = tpu.concatenate %52, %53 in 1 : vector<2x16xf32>, vector<2x240xf32> -> vector<2x256xf32>
    %55 = vector.broadcast %39 : vector<1x256xf32> to vector<2x256xf32>
    %56 = arith.mulf %54, %55 : vector<2x256xf32>
    %57 = vector.extract_strided_slice %14 {offsets = [0, 16], sizes = [2, 240], strides = [1, 1]} : vector<2x256xf32> to vector<2x240xf32>
    %58 = vector.extract_strided_slice %14 {offsets = [0, 0], sizes = [2, 16], strides = [1, 1]} : vector<2x256xf32> to vector<2x16xf32>
    %59 = tpu.concatenate %57, %58 in 1 : vector<2x240xf32>, vector<2x16xf32> -> vector<2x256xf32>
    %60 = vector.broadcast %43 : vector<1x256xf32> to vector<2x256xf32>
    %61 = arith.mulf %59, %60 : vector<2x256xf32>
    %62 = vector.extract_strided_slice %18 {offsets = [0, 240], sizes = [2, 16], strides = [1, 1]} : vector<2x256xf32> to vector<2x16xf32>
    %63 = vector.extract_strided_slice %18 {offsets = [0, 0], sizes = [2, 240], strides = [1, 1]} : vector<2x256xf32> to vector<2x240xf32>
    %64 = tpu.concatenate %62, %63 in 1 : vector<2x16xf32>, vector<2x240xf32> -> vector<2x256xf32>
    %65 = vector.broadcast %39 : vector<1x256xf32> to vector<2x256xf32>
    %66 = arith.mulf %64, %65 : vector<2x256xf32>
    %67 = vector.extract_strided_slice %18 {offsets = [0, 16], sizes = [2, 240], strides = [1, 1]} : vector<2x256xf32> to vector<2x240xf32>
    %68 = vector.extract_strided_slice %18 {offsets = [0, 0], sizes = [2, 16], strides = [1, 1]} : vector<2x256xf32> to vector<2x16xf32>
    %69 = tpu.concatenate %67, %68 in 1 : vector<2x240xf32>, vector<2x16xf32> -> vector<2x256xf32>
    %70 = vector.broadcast %43 : vector<1x256xf32> to vector<2x256xf32>
    %71 = arith.mulf %69, %70 : vector<2x256xf32>
    %72 = vector.extract_strided_slice %15 {offsets = [0, 240], sizes = [2, 16], strides = [1, 1]} : vector<2x256xf32> to vector<2x16xf32>
    %73 = vector.extract_strided_slice %15 {offsets = [0, 0], sizes = [2, 240], strides = [1, 1]} : vector<2x256xf32> to vector<2x240xf32>
    %74 = tpu.concatenate %72, %73 in 1 : vector<2x16xf32>, vector<2x240xf32> -> vector<2x256xf32>
    %75 = vector.broadcast %39 : vector<1x256xf32> to vector<2x256xf32>
    %76 = arith.mulf %74, %75 : vector<2x256xf32>
    %77 = vector.extract_strided_slice %15 {offsets = [0, 16], sizes = [2, 240], strides = [1, 1]} : vector<2x256xf32> to vector<2x240xf32>
    %78 = vector.extract_strided_slice %15 {offsets = [0, 0], sizes = [2, 16], strides = [1, 1]} : vector<2x256xf32> to vector<2x16xf32>
    %79 = tpu.concatenate %77, %78 in 1 : vector<2x240xf32>, vector<2x16xf32> -> vector<2x256xf32>
    %80 = vector.broadcast %43 : vector<1x256xf32> to vector<2x256xf32>
    %81 = arith.mulf %79, %80 : vector<2x256xf32>
    %c1_13 = arith.constant 1 : index
    %82 = memref.load %arg1[%c1_13] : memref<27xf32, #tpu.memory_space<smem>>
    %83 = vector.broadcast %82 : f32 to vector<2x256xf32>
    %84 = arith.mulf %83, %56 : vector<2x256xf32>
    %c4 = arith.constant 4 : index
    %85 = memref.load %arg1[%c4] : memref<27xf32, #tpu.memory_space<smem>>
    %86 = vector.broadcast %85 : f32 to vector<2x256xf32>
    %87 = arith.mulf %86, %14 : vector<2x256xf32>
    %88 = arith.addf %84, %87 : vector<2x256xf32>
    %c7 = arith.constant 7 : index
    %89 = memref.load %arg1[%c7] : memref<27xf32, #tpu.memory_space<smem>>
    %90 = vector.broadcast %89 : f32 to vector<2x256xf32>
    %91 = arith.mulf %90, %61 : vector<2x256xf32>
    %92 = arith.addf %88, %91 : vector<2x256xf32>
    %c10 = arith.constant 10 : index
    %93 = memref.load %arg1[%c10] : memref<27xf32, #tpu.memory_space<smem>>
    %94 = vector.broadcast %93 : f32 to vector<2x256xf32>
    %95 = arith.mulf %94, %66 : vector<2x256xf32>
    %96 = arith.addf %92, %95 : vector<2x256xf32>
    %c13 = arith.constant 13 : index
    %97 = memref.load %arg1[%c13] : memref<27xf32, #tpu.memory_space<smem>>
    %98 = vector.broadcast %97 : f32 to vector<2x256xf32>
    %99 = arith.mulf %98, %18 : vector<2x256xf32>
    %100 = arith.addf %96, %99 : vector<2x256xf32>
    %c16 = arith.constant 16 : index
    %101 = memref.load %arg1[%c16] : memref<27xf32, #tpu.memory_space<smem>>
    %102 = vector.broadcast %101 : f32 to vector<2x256xf32>
    %103 = arith.mulf %102, %71 : vector<2x256xf32>
    %104 = arith.addf %100, %103 : vector<2x256xf32>
    %c19 = arith.constant 19 : index
    %105 = memref.load %arg1[%c19] : memref<27xf32, #tpu.memory_space<smem>>
    %106 = vector.broadcast %105 : f32 to vector<2x256xf32>
    %107 = arith.mulf %106, %76 : vector<2x256xf32>
    %108 = arith.addf %104, %107 : vector<2x256xf32>
    %c22 = arith.constant 22 : index
    %109 = memref.load %arg1[%c22] : memref<27xf32, #tpu.memory_space<smem>>
    %110 = vector.broadcast %109 : f32 to vector<2x256xf32>
    %111 = arith.mulf %110, %15 : vector<2x256xf32>
    %112 = arith.addf %108, %111 : vector<2x256xf32>
    %c25 = arith.constant 25 : index
    %113 = memref.load %arg1[%c25] : memref<27xf32, #tpu.memory_space<smem>>
    %114 = vector.broadcast %113 : f32 to vector<2x256xf32>
    %115 = arith.mulf %114, %81 : vector<2x256xf32>
    %116 = arith.addf %112, %115 : vector<2x256xf32>
    %c0_14 = arith.constant 0 : index
    %117 = memref.load %arg1[%c0_14] : memref<27xf32, #tpu.memory_space<smem>>
    %118 = vector.broadcast %117 : f32 to vector<2x256xf32>
    %119 = arith.mulf %118, %56 : vector<2x256xf32>
    %c3_15 = arith.constant 3 : index
    %120 = memref.load %arg1[%c3_15] : memref<27xf32, #tpu.memory_space<smem>>
    %121 = vector.broadcast %120 : f32 to vector<2x256xf32>
    %122 = arith.mulf %121, %14 : vector<2x256xf32>
    %123 = arith.addf %119, %122 : vector<2x256xf32>
    %c6 = arith.constant 6 : index
    %124 = memref.load %arg1[%c6] : memref<27xf32, #tpu.memory_space<smem>>
    %125 = vector.broadcast %124 : f32 to vector<2x256xf32>
    %126 = arith.mulf %125, %61 : vector<2x256xf32>
    %127 = arith.addf %123, %126 : vector<2x256xf32>
    %c9 = arith.constant 9 : index
    %128 = memref.load %arg1[%c9] : memref<27xf32, #tpu.memory_space<smem>>
    %129 = vector.broadcast %128 : f32 to vector<2x256xf32>
    %130 = arith.mulf %129, %66 : vector<2x256xf32>
    %131 = arith.addf %127, %130 : vector<2x256xf32>
    %c12 = arith.constant 12 : index
    %132 = memref.load %arg1[%c12] : memref<27xf32, #tpu.memory_space<smem>>
    %133 = vector.broadcast %132 : f32 to vector<2x256xf32>
    %134 = arith.mulf %133, %18 : vector<2x256xf32>
    %135 = arith.addf %131, %134 : vector<2x256xf32>
    %c15 = arith.constant 15 : index
    %136 = memref.load %arg1[%c15] : memref<27xf32, #tpu.memory_space<smem>>
    %137 = vector.broadcast %136 : f32 to vector<2x256xf32>
    %138 = arith.mulf %137, %71 : vector<2x256xf32>
    %139 = arith.addf %135, %138 : vector<2x256xf32>
    %c18 = arith.constant 18 : index
    %140 = memref.load %arg1[%c18] : memref<27xf32, #tpu.memory_space<smem>>
    %141 = vector.broadcast %140 : f32 to vector<2x256xf32>
    %142 = arith.mulf %141, %76 : vector<2x256xf32>
    %143 = arith.addf %139, %142 : vector<2x256xf32>
    %c21 = arith.constant 21 : index
    %144 = memref.load %arg1[%c21] : memref<27xf32, #tpu.memory_space<smem>>
    %145 = vector.broadcast %144 : f32 to vector<2x256xf32>
    %146 = arith.mulf %145, %15 : vector<2x256xf32>
    %147 = arith.addf %143, %146 : vector<2x256xf32>
    %c24 = arith.constant 24 : index
    %148 = memref.load %arg1[%c24] : memref<27xf32, #tpu.memory_space<smem>>
    %149 = vector.broadcast %148 : f32 to vector<2x256xf32>
    %150 = arith.mulf %149, %81 : vector<2x256xf32>
    %151 = arith.addf %147, %150 : vector<2x256xf32>
    %152 = vector.extract_strided_slice %151 {offsets = [0, 255], sizes = [2, 1], strides = [1, 1]} : vector<2x256xf32> to vector<2x1xf32>
    %153 = vector.extract_strided_slice %151 {offsets = [0, 0], sizes = [2, 255], strides = [1, 1]} : vector<2x256xf32> to vector<2x255xf32>
    %154 = tpu.concatenate %152, %153 in 1 : vector<2x1xf32>, vector<2x255xf32> -> vector<2x256xf32>
    %155 = vector.broadcast %47 : vector<1x256xf32> to vector<2x256xf32>
    %156 = arith.mulf %154, %155 : vector<2x256xf32>
    %157 = arith.addf %116, %156 : vector<2x256xf32>
    %c2_16 = arith.constant 2 : index
    %158 = memref.load %arg1[%c2_16] : memref<27xf32, #tpu.memory_space<smem>>
    %159 = vector.broadcast %158 : f32 to vector<2x256xf32>
    %160 = arith.mulf %159, %56 : vector<2x256xf32>
    %c5 = arith.constant 5 : index
    %161 = memref.load %arg1[%c5] : memref<27xf32, #tpu.memory_space<smem>>
    %162 = vector.broadcast %161 : f32 to vector<2x256xf32>
    %163 = arith.mulf %162, %14 : vector<2x256xf32>
    %164 = arith.addf %160, %163 : vector<2x256xf32>
    %c8 = arith.constant 8 : index
    %165 = memref.load %arg1[%c8] : memref<27xf32, #tpu.memory_space<smem>>
    %166 = vector.broadcast %165 : f32 to vector<2x256xf32>
    %167 = arith.mulf %166, %61 : vector<2x256xf32>
    %168 = arith.addf %164, %167 : vector<2x256xf32>
    %c11 = arith.constant 11 : index
    %169 = memref.load %arg1[%c11] : memref<27xf32, #tpu.memory_space<smem>>
    %170 = vector.broadcast %169 : f32 to vector<2x256xf32>
    %171 = arith.mulf %170, %66 : vector<2x256xf32>
    %172 = arith.addf %168, %171 : vector<2x256xf32>
    %c14 = arith.constant 14 : index
    %173 = memref.load %arg1[%c14] : memref<27xf32, #tpu.memory_space<smem>>
    %174 = vector.broadcast %173 : f32 to vector<2x256xf32>
    %175 = arith.mulf %174, %18 : vector<2x256xf32>
    %176 = arith.addf %172, %175 : vector<2x256xf32>
    %c17 = arith.constant 17 : index
    %177 = memref.load %arg1[%c17] : memref<27xf32, #tpu.memory_space<smem>>
    %178 = vector.broadcast %177 : f32 to vector<2x256xf32>
    %179 = arith.mulf %178, %71 : vector<2x256xf32>
    %180 = arith.addf %176, %179 : vector<2x256xf32>
    %c20 = arith.constant 20 : index
    %181 = memref.load %arg1[%c20] : memref<27xf32, #tpu.memory_space<smem>>
    %182 = vector.broadcast %181 : f32 to vector<2x256xf32>
    %183 = arith.mulf %182, %76 : vector<2x256xf32>
    %184 = arith.addf %180, %183 : vector<2x256xf32>
    %c23 = arith.constant 23 : index
    %185 = memref.load %arg1[%c23] : memref<27xf32, #tpu.memory_space<smem>>
    %186 = vector.broadcast %185 : f32 to vector<2x256xf32>
    %187 = arith.mulf %186, %15 : vector<2x256xf32>
    %188 = arith.addf %184, %187 : vector<2x256xf32>
    %c26 = arith.constant 26 : index
    %189 = memref.load %arg1[%c26] : memref<27xf32, #tpu.memory_space<smem>>
    %190 = vector.broadcast %189 : f32 to vector<2x256xf32>
    %191 = arith.mulf %190, %81 : vector<2x256xf32>
    %192 = arith.addf %188, %191 : vector<2x256xf32>
    %193 = vector.extract_strided_slice %192 {offsets = [0, 1], sizes = [2, 255], strides = [1, 1]} : vector<2x256xf32> to vector<2x255xf32>
    %194 = vector.extract_strided_slice %192 {offsets = [0, 0], sizes = [2, 1], strides = [1, 1]} : vector<2x256xf32> to vector<2x1xf32>
    %195 = tpu.concatenate %193, %194 in 1 : vector<2x255xf32>, vector<2x1xf32> -> vector<2x256xf32>
    %196 = vector.broadcast %51 : vector<1x256xf32> to vector<2x256xf32>
    %197 = arith.mulf %195, %196 : vector<2x256xf32>
    %198 = arith.addf %157, %197 : vector<2x256xf32>
    %199 = arith.negf %198 : vector<2x256xf32>
    %200 = math.exp %199 : vector<2x256xf32>
    %cst_17 = arith.constant 1.000000e+00 : f32
    %201 = vector.broadcast %cst_17 : f32 to vector<2x256xf32>
    %202 = arith.addf %201, %200 : vector<2x256xf32>
    %203 = arith.divf %201, %202 : vector<2x256xf32>
    %c0_18 = arith.constant 0 : index
    %c0_19 = arith.constant 0 : index
    %c0_20 = arith.constant 0 : index
    %204 = vector.load %arg3[%c0_18, %c0_19, %c0_20] : memref<2x1x256xf32, #tpu.memory_space<vmem>>, vector<2x1x256xf32>
    %205 = vector.shape_cast %204 : vector<2x1x256xf32> to vector<2x256xf32>
    %206 = vector.shape_cast %203 : vector<2x256xf32> to vector<2x1x256xf32>
    tpu.vector_store %arg3[%c0_18, %c0_19, %c0_20], %206 {strides = array<i32>} : memref<2x1x256xf32, #tpu.memory_space<vmem>>, vector<2x1x256xf32>,
    return
  }
  func.func @transform_0(%arg0: i32) -> i32 {
    %c0_i32 = arith.constant 0 : i32
    %c0_i32_0 = arith.constant 0 : i32
    return %c0_i32 : i32
  }
  func.func @transform_1(%arg0: i32) -> (i32, i32, i32) {
    %c0_i32 = arith.constant 0 : i32
    %c0_i32_0 = arith.constant 0 : i32
    %c0_i32_1 = arith.constant 0 : i32
    return %arg0, %c0_i32, %c0_i32_0 : i32, i32, i32
  }
  func.func @transform_2(%arg0: i32) -> (i32, i32, i32) {
    %c0_i32 = arith.constant 0 : i32
    %c0_i32_0 = arith.constant 0 : i32
    %c0_i32_1 = arith.constant 0 : i32
    return %arg0, %c0_i32, %c0_i32_0 : i32, i32, i32
  }
}

</mosaic_0001>

<llo_original>
// kernel: tpu_custom_call.1
$region0: #{tpu_custom_call.1}
  #allocation0 [shape = 'u32[]', space=smem, size = 0x4, offset = 0x4, fixed_abs, tag = 'smem constant byte address 0x4 - core index']
  #allocation1 [shape = 'u32[72,128]{1,0:T(1,128)}', space=vmem, size = 0x9000, scoped, tag = 'internal scratch']
  %s0 = inlined_call_operand.hbm [shape: f32[27], index: 0, kind: input, shape index: {}]
  %s1 = inlined_call_operand.hbm [shape: f32[2,4,256], index: 1, kind: input, shape index: {}]
  %s2 = inlined_call_operand.hbm [shape: f32[2,1,256], index: 2, kind: output, shape index: {}]
  %s3 = sld [smem:[#allocation0]]
  $region26: #{tpu_custom_call.1} parent=0
    _
  %s5 = ssub.s32 1, %s3
  %s6 = scalar_select 0, %s5, %s3
  $region1: #{tpu_custom_call.1} parent=0
    #allocation2 [shape = 'u8[512]{0}', space=smem, size = 0x200, scoped, tag = 'input window, operand 0, single buffered']
    #allocation3 [shape = 's32[1]{0}', space=sflag, size = 0x4, scoped, tag = 'scoped memory for tpu_custom_call.1']
    #allocation4 [shape = 's32[1]{0}', space=sflag, size = 0x4, scoped, tag = 'scoped memory for tpu_custom_call.1']
    #allocation5 [shape = 's32[1]{0}', space=sflag, size = 0x4, scoped, tag = 'scoped memory for tpu_custom_call.1']
    #allocation6 [shape = 'u8[8192]{0}', space=vmem, size = 0x2000, scoped, tag = 'input window, operand 1, single buffered']
    #allocation7 [shape = 'u8[2048]{0}', space=vmem, size = 0x800, scoped, tag = 'output window, operand 0, single buffered']
    %7 = vsyncpa [#allocation5], 0
    %8 = vsyncpa [#allocation3], 0
    %9 = vsyncpa [#allocation4], 0
    // Predicated region
    $region2: #{tpu_custom_call.1} parent=1 // pred_check
      _
    $region3: #{tpu_custom_call.1} parent=1 // pred_check_branch
      %11 = sbr.rel (0) target = $region5
    $region4: #{tpu_custom_call.1} parent=1 // pred_region
      %13 = vsyncadd [#allocation5], 0
      %s15 = sshll.u32 %s0, 4
      %s16 = int_to_ptr.hbm [resolvable:$true] %s15
      %18 = dma.hbm_to_smem %s16, 16, [#allocation2], [#allocation5]
    $region5: #{tpu_custom_call.1} parent=1 // pred_fallthru
      _
    // Predicated region
    $region6: #{tpu_custom_call.1} parent=1 // pred_check
      _
    $region7: #{tpu_custom_call.1} parent=1 // pred_check_branch
      %20 = sbr.rel (0) target = $region9
    $region8: #{tpu_custom_call.1} parent=1 // pred_region
      %22 = vsyncadd [#allocation3], 0
      %s23 = sshll.u32 %s1, 4
      %s24 = int_to_ptr.hbm [resolvable:$true] %s23
      %s25 = sshll.u32 [#allocation6], 4
      %s26 = int_to_ptr.vmem [resolvable:$true] %s25
      %31 = dma.hbm_to_vmem [thread:$0]  %s24, 256, %s26, [#allocation3], 128, 128, 8
    $region9: #{tpu_custom_call.1} parent=1 // pred_fallthru
      _
    // Predicated region
    $region10: #{tpu_custom_call.1} parent=1 // pred_check
      _
    $region11: #{tpu_custom_call.1} parent=1 // pred_check_branch
      %33 = sbr.rel (0) target = $region13
    $region12: #{tpu_custom_call.1} parent=1 // pred_region
      %35 = dma.done [#allocation5], 16
    $region13: #{tpu_custom_call.1} parent=1 // pred_fallthru
      _
    // Predicated region
    $region14: #{tpu_custom_call.1} parent=1 // pred_check
      _
    $region15: #{tpu_custom_call.1} parent=1 // pred_check_branch
      %37 = sbr.rel (0) target = $region17
    $region16: #{tpu_custom_call.1} parent=1 // pred_region
      %39 = dma.done [#allocation3], 256
    $region17: #{tpu_custom_call.1} parent=1 // pred_fallthru
      _
    %40 = sfence
    %v41 = vld [vmem:[#allocation6] ss:$4 sm:$0x3]
    %s42 = scalar_lea.vmem [#allocation6], 8
    %v43 = vld [vmem:[%s42] ss:$4 sm:$0x3]
    %s44 = scalar_lea.vmem [#allocation6], 1
    %v45 = vld [vmem:[%s44] ss:$4 sm:$0x3]
    %s46 = scalar_lea.vmem [#allocation6], 9
    %v47 = vld [vmem:[%s46] ss:$4 sm:$0x3]
    %v48 = vmin.f32 %v41, %v45
    %v49 = vmin.f32 %v43, %v47
    %v50 = vmax.f32 %v41, %v45
    %v51 = vmax.f32 %v43, %v47
    %v52 = vadd.f32 %v41, %v45
    %v53 = vadd.f32 %v43, %v47
    %s54 = scalar_lea.vmem [#allocation6], 2
    %v55 = vld [vmem:[%s54] ss:$4 sm:$0x3]
    %s56 = scalar_lea.vmem [#allocation6], 10
    %v57 = vld [vmem:[%s56] ss:$4 sm:$0x3]
    %v58 = vmin.f32 %v48, %v55
    %v59 = vmin.f32 %v49, %v57
    %v60 = vmax.f32 %v50, %v55
    %v61 = vmax.f32 %v51, %v57
    %v62 = vadd.f32 %v52, %v55
    %v63 = vadd.f32 %v53, %v57
    %s64 = scalar_lea.vmem [#allocation6], 3
    %v65 = vld [vmem:[%s64] ss:$4 sm:$0x3]
    %s66 = scalar_lea.vmem [#allocation6], 11
    %v67 = vld [vmem:[%s66] ss:$4 sm:$0x3]
    %v68 = vmin.f32 %v58, %v65
    %v69 = vmin.f32 %v59, %v67
    %v70 = vmax.f32 %v60, %v65
    %v71 = vmax.f32 %v61, %v67
    %v72 = vadd.f32 %v62, %v65
    %v73 = vadd.f32 %v63, %v67
    %v74 = vmul.f32 %v72, 0.25
    %v75 = vmul.f32 %v73, 0.25
    %v76 = vlaneseq
    %v77 = vand.u32 %v76, 127
    %v78 = vadd.s32 %v77, 128
    %vm79 = vcmp.lt.s32.totalorder %v77, 0
    %v80 = vsub.s32 0, %v77
    %v81 = vsel %vm79, %v80, %v77
    %v82 = vshrl.u32 %v81, 4
    %v83 = vand.u32 %v81, 15
    %v84 = vsub.s32 0, %v83
    %v85 = vsel %vm79, %v84, %v83
    %vm86 = vcmp.lt.s32.totalorder %v78, 0
    %v87 = vsub.s32 0, %v78
    %v88 = vsel %vm86, %v87, %v78
    %v89 = vshrl.u32 %v88, 4
    %v90 = vand.u32 %v88, 15
    %v91 = vsub.s32 0, %v90
    %v92 = vsel %vm86, %v91, %v90
    %vm93 = vcmp.ne.s32.totalorder %v85, 0
    %vm94 = vcmp.ne.s32.totalorder %v92, 0
    %vm95 = vcmp.lt.s32.totalorder %v85, 0
    %vm96 = vcmp.lt.s32.totalorder %v92, 0
    %vm97 = vmand %vm95, %vm93
    %vm98 = vmand %vm96, %vm94
    %v99 = vadd.s32 %v85, 16
    %v100 = vadd.s32 %v92, 16
    %v101 = vsel %vm97, %v99, %v85
    %v102 = vsel %vm98, %v100, %v92
    %vm103 = vcmp.ge.s32.totalorder %v77, 16
    %vm104 = vcmp.ge.s32.totalorder %v78, 16
    %v105 = vsel %vm103, 1, 0
    %v106 = vsel %vm104, 1, 0
    %v107 = vcvt.s32.f32 %v105
    %v108 = vcvt.s32.f32 %v106
    %vm109 = vcmp.lt.s32.totalorder %v77, 240
    %vm110 = vcmp.lt.s32.totalorder %v78, 240
    %v111 = vsel %vm109, 1, 0
    %v112 = vsel %vm110, 1, 0
    %v113 = vcvt.s32.f32 %v111
    %v114 = vcvt.s32.f32 %v112
    %vm115 = vcmp.ge.s32.totalorder %v101, 1
    %vm116 = vcmp.ge.s32.totalorder %v102, 1
    %v117 = vsel %vm115, 1, 0
    %v118 = vsel %vm116, 1, 0
    %v119 = vcvt.s32.f32 %v117
    %v120 = vcvt.s32.f32 %v118
    %vm121 = vcmp.lt.s32.totalorder %v101, 15
    %vm122 = vcmp.lt.s32.totalorder %v102, 15
    %v123 = vsel %vm121, 1, 0
    %v124 = vsel %vm122, 1, 0
    %v125 = vcvt.s32.f32 %v123
    %v126 = vcvt.s32.f32 %v124
    %129 = vst [vmem:[#allocation1] ss:$9 sm:$0xff] %v68
    %s130 = scalar_lea.vmem [#allocation1], 1
    %131 = vst [vmem:[%s130] ss:$9 sm:$0xff] %v69
    %v132 = vld [vmem:[#allocation1 + $0x9] sm:$0xff]
    %133 = vrot.lane.b32.xlu0 %v132, 16
    %v134 = vpop.permute.xlu0 %133
    %136 = vst [vmem:[#allocation1] ss:$9 sm:$0xff] %v68
    %s137 = scalar_lea.vmem [#allocation1], 1
    %138 = vst [vmem:[%s137] ss:$9 sm:$0xff] %v69
    %v139 = vld [vmem:[#allocation1] sm:$0xff]
    %v140 = vld [vmem:[#allocation1 + $0x9] sm:$0xff]
    %141 = vrot.lane.b32.xlu0 %v139, 16
    %v142 = vpop.permute.xlu0 %141
    %143 = vrot.lane.b32.xlu0 %v140, 16
    %v144 = vpop.permute.xlu0 %143
    %vm145 = vcmask 130048
    %v146 = vsel %vm145, %v142, %v144
    %v149 = vsel %vm145, %v134, %v142
    %v150 = vmul.f32 %v149, %v107
    %v151 = vmul.f32 %v146, %v108
    %152 = vst [vmem:[#allocation1] ss:$9 sm:$0xff] %v68
    %s153 = scalar_lea.vmem [#allocation1], 1
    %154 = vst [vmem:[%s153] ss:$9 sm:$0xff] %v69
    %v155 = vld [vmem:[#allocation1] sm:$0xff]
    %v156 = vld [vmem:[#allocation1 + $0x9] sm:$0xff]
    %157 = vrot.lane.b32.xlu0 %v155, 112
    %v158 = vpop.permute.xlu0 %157
    %159 = vrot.lane.b32.xlu0 %v156, 112
    %v160 = vpop.permute.xlu0 %159
    %vm161 = vcmask 916480
    %v162 = vsel %vm161, %v158, %v160
    %165 = vst [vmem:[#allocation1] ss:$9 sm:$0xff] %v68
    %s166 = scalar_lea.vmem [#allocation1], 1
    %167 = vst [vmem:[%s166] ss:$9 sm:$0xff] %v69
    %v168 = vld [vmem:[#allocation1] sm:$0xff]
    %169 = vrot.lane.b32.xlu0 %v168, 112
    %v170 = vpop.permute.xlu0 %169
    %v172 = vsel %vm161, %v160, %v170
    %v173 = vmul.f32 %v162, %v113
    %v174 = vmul.f32 %v172, %v114
    %177 = vst [vmem:[#allocation1] ss:$9 sm:$0xff] %v74
    %s178 = scalar_lea.vmem [#allocation1], 1
    %179 = vst [vmem:[%s178] ss:$9 sm:$0xff] %v75
    %v180 = vld [vmem:[#allocation1 + $0x9] sm:$0xff]
    %181 = vrot.lane.b32.xlu0 %v180, 16
    %v182 = vpop.permute.xlu0 %181
    %184 = vst [vmem:[#allocation1] ss:$9 sm:$0xff] %v74
    %s185 = scalar_lea.vmem [#allocation1], 1
    %186 = vst [vmem:[%s185] ss:$9 sm:$0xff] %v75
    %v187 = vld [vmem:[#allocation1] sm:$0xff]
    %v188 = vld [vmem:[#allocation1 + $0x9] sm:$0xff]
    %189 = vrot.lane.b32.xlu0 %v187, 16
    %v190 = vpop.permute.xlu0 %189
    %191 = vrot.lane.b32.xlu0 %v188, 16
    %v192 = vpop.permute.xlu0 %191
    %v193 = vsel %vm145, %v190, %v192
    %v196 = vsel %vm145, %v182, %v190
    %v197 = vmul.f32 %v196, %v107
    %v198 = vmul.f32 %v193, %v108
    %199 = vst [vmem:[#allocation1] ss:$9 sm:$0xff] %v74
    %s200 = scalar_lea.vmem [#allocation1], 1
    %201 = vst [vmem:[%s200] ss:$9 sm:$0xff] %v75
    %v202 = vld [vmem:[#allocation1] sm:$0xff]
    %v203 = vld [vmem:[#allocation1 + $0x9] sm:$0xff]
    %204 = vrot.lane.b32.xlu0 %v202, 112
    %v205 = vpop.permute.xlu0 %204
    %206 = vrot.lane.b32.xlu0 %v203, 112
    %v207 = vpop.permute.xlu0 %206
    %v208 = vsel %vm161, %v205, %v207
    %211 = vst [vmem:[#allocation1] ss:$9 sm:$0xff] %v74
    %s212 = scalar_lea.vmem [#allocation1], 1
    %213 = vst [vmem:[%s212] ss:$9 sm:$0xff] %v75
    %v214 = vld [vmem:[#allocation1] sm:$0xff]
    %215 = vrot.lane.b32.xlu0 %v214, 112
    %v216 = vpop.permute.xlu0 %215
    %v218 = vsel %vm161, %v207, %v216
    %v219 = vmul.f32 %v208, %v113
    %v220 = vmul.f32 %v218, %v114
    %223 = vst [vmem:[#allocation1] ss:$9 sm:$0xff] %v70
    %s224 = scalar_lea.vmem [#allocation1], 1
    %225 = vst [vmem:[%s224] ss:$9 sm:$0xff] %v71
    %v226 = vld [vmem:[#allocation1 + $0x9] sm:$0xff]
    %227 = vrot.lane.b32.xlu0 %v226, 16
    %v228 = vpop.permute.xlu0 %227
    %230 = vst [vmem:[#allocation1] ss:$9 sm:$0xff] %v70
    %s231 = scalar_lea.vmem [#allocation1], 1
    %232 = vst [vmem:[%s231] ss:$9 sm:$0xff] %v71
    %v233 = vld [vmem:[#allocation1] sm:$0xff]
    %v234 = vld [vmem:[#allocation1 + $0x9] sm:$0xff]
    %235 = vrot.lane.b32.xlu0 %v233, 16
    %v236 = vpop.permute.xlu0 %235
    %237 = vrot.lane.b32.xlu0 %v234, 16
    %v238 = vpop.permute.xlu0 %237
    %v239 = vsel %vm145, %v236, %v238
    %v242 = vsel %vm145, %v228, %v236
    %v243 = vmul.f32 %v242, %v107
    %v244 = vmul.f32 %v239, %v108
    %245 = vst [vmem:[#allocation1] ss:$9 sm:$0xff] %v70
    %s246 = scalar_lea.vmem [#allocation1], 1
    %247 = vst [vmem:[%s246] ss:$9 sm:$0xff] %v71
    %v248 = vld [vmem:[#allocation1] sm:$0xff]
    %v249 = vld [vmem:[#allocation1 + $0x9] sm:$0xff]
    %250 = vrot.lane.b32.xlu0 %v248, 112
    %v251 = vpop.permute.xlu0 %250
    %252 = vrot.lane.b32.xlu0 %v249, 112
    %v253 = vpop.permute.xlu0 %252
    %v254 = vsel %vm161, %v251, %v253
    %257 = vst [vmem:[#allocation1] ss:$9 sm:$0xff] %v70
    %s258 = scalar_lea.vmem [#allocation1], 1
    %259 = vst [vmem:[%s258] ss:$9 sm:$0xff] %v71
    %v260 = vld [vmem:[#allocation1] sm:$0xff]
    %261 = vrot.lane.b32.xlu0 %v260, 112
    %v262 = vpop.permute.xlu0 %261
    %v264 = vsel %vm161, %v253, %v262
    %v265 = vmul.f32 %v254, %v113
    %v266 = vmul.f32 %v264, %v114
    %s267 = sld [smem:[#allocation2 + $0x1]]
    %v268 = vstv %s267
    %v269 = vmul.f32 %v268, %v150
    %v270 = vmul.f32 %v268, %v151
    %s271 = sld [smem:[#allocation2 + $0x4]]
    %v272 = vstv %s271
    %v273 = vmul.f32 %v272, %v68
    %v274 = vmul.f32 %v272, %v69
    %277 = vst [vmem:[#allocation1] ss:$9 sm:$0xff] %v273
    %s278 = scalar_lea.vmem [#allocation1], 1
    %279 = vst [vmem:[%s278] ss:$9 sm:$0xff] %v274
    %v280 = vld [vmem:[#allocation1] sm:$0xff]
    %v281 = vld [vmem:[#allocation1 + $0x9] sm:$0xff]
    %v284 = vadd.f32 %v269, %v280
    %v285 = vadd.f32 %v270, %v281
    %s286 = sld [smem:[#allocation2 + $0x7]]
    %v287 = vstv %s286
    %v288 = vmul.f32 %v287, %v173
    %v289 = vmul.f32 %v287, %v174
    %v290 = vadd.f32 %v284, %v288
    %v291 = vadd.f32 %v285, %v289
    %s292 = sld [smem:[#allocation2 + $0xa]]
    %v293 = vstv %s292
    %v294 = vmul.f32 %v293, %v197
    %v295 = vmul.f32 %v293, %v198
    %v296 = vadd.f32 %v290, %v294
    %v297 = vadd.f32 %v291, %v295
    %s298 = sld [smem:[#allocation2 + $0xd]]
    %v299 = vstv %s298
    %v300 = vmul.f32 %v299, %v74
    %v301 = vmul.f32 %v299, %v75
    %304 = vst [vmem:[#allocation1] ss:$9 sm:$0xff] %v300
    %s305 = scalar_lea.vmem [#allocation1], 1
    %306 = vst [vmem:[%s305] ss:$9 sm:$0xff] %v301
    %v307 = vld [vmem:[#allocation1] sm:$0xff]
    %v308 = vld [vmem:[#allocation1 + $0x9] sm:$0xff]
    %v311 = vadd.f32 %v296, %v307
    %v312 = vadd.f32 %v297, %v308
    %s313 = sld [smem:[#allocation2 + $0x10]]
    %v314 = vstv %s313
    %v315 = vmul.f32 %v314, %v219
    %v316 = vmul.f32 %v314, %v220
    %v317 = vadd.f32 %v311, %v315
    %v318 = vadd.f32 %v312, %v316
    %s319 = sld [smem:[#allocation2 + $0x13]]
    %v320 = vstv %s319
    %v321 = vmul.f32 %v320, %v243
    %v322 = vmul.f32 %v320, %v244
    %v323 = vadd.f32 %v317, %v321
    %v324 = vadd.f32 %v318, %v322
    %s325 = sld [smem:[#allocation2 + $0x16]]
    %v326 = vstv %s325
    %v327 = vmul.f32 %v326, %v70
    %v328 = vmul.f32 %v326, %v71
    %331 = vst [vmem:[#allocation1] ss:$9 sm:$0xff] %v327
    %s332 = scalar_lea.vmem [#allocation1], 1
    %333 = vst [vmem:[%s332] ss:$9 sm:$0xff] %v328
    %v334 = vld [vmem:[#allocation1] sm:$0xff]
    %v335 = vld [vmem:[#allocation1 + $0x9] sm:$0xff]
    %v338 = vadd.f32 %v323, %v334
    %v339 = vadd.f32 %v324, %v335
    %s340 = sld [smem:[#allocation2 + $0x19]]
    %v341 = vstv %s340
    %v342 = vmul.f32 %v341, %v265
    %v343 = vmul.f32 %v341, %v266
    %v344 = vadd.f32 %v338, %v342
    %v345 = vadd.f32 %v339, %v343
    %s346 = sld [smem:[#allocation2]]
    %v347 = vstv %s346
    %v348 = vmul.f32 %v347, %v150
    %v349 = vmul.f32 %v347, %v151
    %s350 = sld [smem:[#allocation2 + $0x3]]
    %v351 = vstv %s350
    %v352 = vmul.f32 %v351, %v68
    %v353 = vmul.f32 %v351, %v69
    %356 = vst [vmem:[#allocation1] ss:$9 sm:$0xff] %v352
    %s357 = scalar_lea.vmem [#allocation1], 1
    %358 = vst [vmem:[%s357] ss:$9 sm:$0xff] %v353
    %v359 = vld [vmem:[#allocation1] sm:$0xff]
    %v360 = vld [vmem:[#allocation1 + $0x9] sm:$0xff]
    %v363 = vadd.f32 %v348, %v359
    %v364 = vadd.f32 %v349, %v360
    %s365 = sld [smem:[#allocation2 + $0x6]]
    %v366 = vstv %s365
    %v367 = vmul.f32 %v366, %v173
    %v368 = vmul.f32 %v366, %v174
    %v369 = vadd.f32 %v363, %v367
    %v370 = vadd.f32 %v364, %v368
    %s371 = sld [smem:[#allocation2 + $0x9]]
    %v372 = vstv %s371
    %v373 = vmul.f32 %v372, %v197
    %v374 = vmul.f32 %v372, %v198
    %v375 = vadd.f32 %v369, %v373
    %v376 = vadd.f32 %v370, %v374
    %s377 = sld [smem:[#allocation2 + $0xc]]
    %v378 = vstv %s377
    %v379 = vmul.f32 %v378, %v74
    %v380 = vmul.f32 %v378, %v75
    %383 = vst [vmem:[#allocation1] ss:$9 sm:$0xff] %v379
    %s384 = scalar_lea.vmem [#allocation1], 1
    %385 = vst [vmem:[%s384] ss:$9 sm:$0xff] %v380
    %v386 = vld [vmem:[#allocation1] sm:$0xff]
    %v387 = vld [vmem:[#allocation1 + $0x9] sm:$0xff]
    %v390 = vadd.f32 %v375, %v386
    %v391 = vadd.f32 %v376, %v387
    %s392 = sld [smem:[#allocation2 + $0xf]]
    %v393 = vstv %s392
    %v394 = vmul.f32 %v393, %v219
    %v395 = vmul.f32 %v393, %v220
    %v396 = vadd.f32 %v390, %v394
    %v397 = vadd.f32 %v391, %v395
    %s398 = sld [smem:[#allocation2 + $0x12]]
    %v399 = vstv %s398
    %v400 = vmul.f32 %v399, %v243
    %v401 = vmul.f32 %v399, %v244
    %v402 = vadd.f32 %v396, %v400
    %v403 = vadd.f32 %v397, %v401
    %s404 = sld [smem:[#allocation2 + $0x15]]
    %v405 = vstv %s404
    %v406 = vmul.f32 %v405, %v70
    %v407 = vmul.f32 %v405, %v71
    %410 = vst [vmem:[#allocation1] ss:$9 sm:$0xff] %v406
    %s411 = scalar_lea.vmem [#allocation1], 1
    %412 = vst [vmem:[%s411] ss:$9 sm:$0xff] %v407
    %v413 = vld [vmem:[#allocation1] sm:$0xff]
    %v414 = vld [vmem:[#allocation1 + $0x9] sm:$0xff]
    %v417 = vadd.f32 %v402, %v413
    %v418 = vadd.f32 %v403, %v414
    %s419 = sld [smem:[#allocation2 + $0x18]]
    %v420 = vstv %s419
    %v421 = vmul.f32 %v420, %v265
    %v422 = vmul.f32 %v420, %v266
    %v423 = vadd.f32 %v417, %v421
    %v424 = vadd.f32 %v418, %v422
    %426 = vrot.lane.b32.xlu0 %v424, 1
    %v427 = vpop.permute.xlu0 %426
    %430 = vrot.lane.b32.xlu0 %v423, 1
    %v431 = vpop.permute.xlu0 %430
    %vm432 = vcmask 7168
    %v433 = vsel %vm432, %v431, %v427
    %v436 = vsel %vm432, %v427, %v431
    %v437 = vmul.f32 %v436, %v119
    %v438 = vmul.f32 %v433, %v120
    %v439 = vadd.f32 %v344, %v437
    %v440 = vadd.f32 %v345, %v438
    %s441 = sld [smem:[#allocation2 + $0x2]]
    %v442 = vstv %s441
    %v443 = vmul.f32 %v442, %v150
    %v444 = vmul.f32 %v442, %v151
    %s445 = sld [smem:[#allocation2 + $0x5]]
    %v446 = vstv %s445
    %v447 = vmul.f32 %v446, %v68
    %v448 = vmul.f32 %v446, %v69
    %451 = vst [vmem:[#allocation1] ss:$9 sm:$0xff] %v447
    %s452 = scalar_lea.vmem [#allocation1], 1
    %453 = vst [vmem:[%s452] ss:$9 sm:$0xff] %v448
    %v454 = vld [vmem:[#allocation1] sm:$0xff]
    %v455 = vld [vmem:[#allocation1 + $0x9] sm:$0xff]
    %v458 = vadd.f32 %v443, %v454
    %v459 = vadd.f32 %v444, %v455
    %s460 = sld [smem:[#allocation2 + $0x8]]
    %v461 = vstv %s460
    %v462 = vmul.f32 %v461, %v173
    %v463 = vmul.f32 %v461, %v174
    %v464 = vadd.f32 %v458, %v462
    %v465 = vadd.f32 %v459, %v463
    %s466 = sld [smem:[#allocation2 + $0xb]]
    %v467 = vstv %s466
    %v468 = vmul.f32 %v467, %v197
    %v469 = vmul.f32 %v467, %v198
    %v470 = vadd.f32 %v464, %v468
    %v471 = vadd.f32 %v465, %v469
    %s472 = sld [smem:[#allocation2 + $0xe]]
    %v473 = vstv %s472
    %v474 = vmul.f32 %v473, %v74
    %v475 = vmul.f32 %v473, %v75
    %478 = vst [vmem:[#allocation1] ss:$9 sm:$0xff] %v474
    %s479 = scalar_lea.vmem [#allocation1], 1
    %480 = vst [vmem:[%s479] ss:$9 sm:$0xff] %v475
    %v481 = vld [vmem:[#allocation1] sm:$0xff]
    %v482 = vld [vmem:[#allocation1 + $0x9] sm:$0xff]
    %v485 = vadd.f32 %v470, %v481
    %v486 = vadd.f32 %v471, %v482
    %s487 = sld [smem:[#allocation2 + $0x11]]
    %v488 = vstv %s487
    %v489 = vmul.f32 %v488, %v219
    %v490 = vmul.f32 %v488, %v220
    %v491 = vadd.f32 %v485, %v489
    %v492 = vadd.f32 %v486, %v490
    %s493 = sld [smem:[#allocation2 + $0x14]]
    %v494 = vstv %s493
    %v495 = vmul.f32 %v494, %v243
    %v496 = vmul.f32 %v494, %v244
    %v497 = vadd.f32 %v491, %v495
    %v498 = vadd.f32 %v492, %v496
    %s499 = sld [smem:[#allocation2 + $0x17]]
    %v500 = vstv %s499
    %v501 = vmul.f32 %v500, %v70
    %v502 = vmul.f32 %v500, %v71
    %505 = vst [vmem:[#allocation1] ss:$9 sm:$0xff] %v501
    %s506 = scalar_lea.vmem [#allocation1], 1
    %507 = vst [vmem:[%s506] ss:$9 sm:$0xff] %v502
    %v508 = vld [vmem:[#allocation1] sm:$0xff]
    %v509 = vld [vmem:[#allocation1 + $0x9] sm:$0xff]
    %v512 = vadd.f32 %v497, %v508
    %v513 = vadd.f32 %v498, %v509
    %s514 = sld [smem:[#allocation2 + $0x1a]]
    %v515 = vstv %s514
    %v516 = vmul.f32 %v515, %v265
    %v517 = vmul.f32 %v515, %v266
    %v518 = vadd.f32 %v512, %v516
    %v519 = vadd.f32 %v513, %v517
    %522 = vrot.lane.b32.xlu0 %v518, 127
    %v523 = vpop.permute.xlu0 %522
    %524 = vrot.lane.b32.xlu0 %v519, 127
    %v525 = vpop.permute.xlu0 %524
    %vm526 = vcmask 1039360
    %v527 = vsel %vm526, %v523, %v525
    %v531 = vsel %vm526, %v525, %v523
    %v532 = vmul.f32 %v527, %v125
    %v533 = vmul.f32 %v531, %v126
    %v534 = vadd.f32 %v439, %v532
    %v535 = vadd.f32 %v440, %v533
    %v536 = vxor.u32 %v534, 2147483648
    %v537 = vxor.u32 %v535, 2147483648
    %v538 = vmul.f32 %v536, 1.442695
    %v539 = vpow.pop %v538
    %v540 = vmul.f32 %v537, 1.442695
    %v541 = vpow.pop %v540
    %v542 = vadd.f32 %v539, 1.0
    %v543 = vadd.f32 %v541, 1.0
    %v544 = vrcp.pop %v542
    %v545 = vmul.f32 %v542, %v544
    %v546 = vsub.f32 1.0, %v545
    %v547 = vmul.f32 %v544, %v546
    %v548 = vadd.f32 %v544, %v547
    %vm549 = vweird.f32 %v542
    %vm550 = vweird.f32 %v544
    %vm551 = vmor %vm549, %vm550
    %v552 = vsel %vm551, %v544, %v548
    %v553 = vand.u32 2147483647, %v542
    %vm554 = vcmp.eq.f32.partialorder %v553, 8.507059e+37
    %v555 = vand.u32 %v542, 2147483648
    %v556 = vor.u32 1.1754944e-38, %v555
    %v557 = vsel %vm554, %v556, %v552
    %v558 = vmul.f32 1.0, %v557
    %v559 = vrcp.pop %v543
    %v560 = vmul.f32 %v543, %v559
    %v561 = vsub.f32 1.0, %v560
    %v562 = vmul.f32 %v559, %v561
    %v563 = vadd.f32 %v559, %v562
    %vm564 = vweird.f32 %v543
    %vm565 = vweird.f32 %v559
    %vm566 = vmor %vm564, %vm565
    %v567 = vsel %vm566, %v559, %v563
    %v568 = vand.u32 2147483647, %v543
    %vm569 = vcmp.eq.f32.partialorder %v568, 8.507059e+37
    %v570 = vand.u32 %v543, 2147483648
    %v571 = vor.u32 1.1754944e-38, %v570
    %v572 = vsel %vm569, %v571, %v567
    %v573 = vmul.f32 1.0, %v572
    %v576 = vrot.slane %v573, 7
    %vm577 = vcmask 1040384
    %v578 = vsel %vm577, %v558, %v576
    %vm579 = vcmask 1041409
    %v580 = vsel %vm579, %v558, %v576
    %v581 = vrot.slane %v580, 1
    %v584 = vlaneseq
    %vm585 = vcmp.ge.s32.totalorder %v584, 0
    %vm586 = vcmp.lt.s32.totalorder %v584, 256
    %vm587 = vmand %vm585, %vm586
    %588 = vst.msk [vmem:[#allocation7] sm:$0x3] %vm587, %v578
    %589 = vst.msk [vmem:[#allocation7 + $0x2] sm:$0x3] %vm587, %v581
    // Predicated region
    $region18: #{tpu_custom_call.1} parent=1 // pred_check
      _
    $region19: #{tpu_custom_call.1} parent=1 // pred_check_branch
      %591 = sbr.rel (0) target = $region21
    $region20: #{tpu_custom_call.1} parent=1 // pred_region
      %593 = vsyncadd [#allocation4], 0
      %s594 = sshll.u32 [#allocation7], 4
      %s595 = int_to_ptr.vmem [resolvable:$true] %s594
      %s596 = sshll.u32 %s2, 4
      %s597 = int_to_ptr.hbm [resolvable:$true] %s596
      %602 = dma.vmem_to_hbm [thread:$0]  %s595, 64, %s597, [#allocation4], 32, 32, 2
    $region21: #{tpu_custom_call.1} parent=1 // pred_fallthru
      _
    // Predicated region
    $region22: #{tpu_custom_call.1} parent=1 // pred_check
      _
    $region23: #{tpu_custom_call.1} parent=1 // pred_check_branch
      %604 = sbr.rel (0) target = $region25
    $region24: #{tpu_custom_call.1} parent=1 // pred_region
      %606 = dma.done [#allocation4], 64
    $region25: #{tpu_custom_call.1} parent=1 // pred_fallthru
      _
    %607 = vsyncpa [#allocation3], 1
    %608 = vsyncpa [#allocation4], 1
    %609 = vsyncpa [#allocation5], 1

</llo_original>
